<compile_context>
chip_gen: v5e
topology: v5e:2x2
jax: 0.10.0
libtpu: 0.0.40
codegen_flags: <defaults>
</compile_context>

<pallas_src>
import functools

import jax
import jax.numpy as jnp
from jax.experimental import pallas as pl
from jax.experimental.pallas import tpu as pltpu

_LANE = 128


def _norm0_kernel(x_ref, out_ref, *, inv_total):
    """Accumulates count(x > 0) over row-tiles; emits count * inv_total.

    x_ref   : [tile_rows, 128]  input block (original dtype)
    out_ref : [1, 1] float32    resident accumulator / final scalar output
    """
    i = pl.program_id(0)

    @pl.when(i == 0)
    def _init():
        out_ref[...] = jnp.zeros_like(out_ref)

    # Indicator of strictly-positive elements (padding is 0 -> contributes 0).
    pos = (x_ref[...] > 0).astype(jnp.float32)            # [tile_rows, 128]
    # Reduce lane axis (XLU) then sublane axis, keepdims -> (1, 1).
    partial = jnp.sum(jnp.sum(pos, axis=1, keepdims=True), axis=0, keepdims=True)
    out_ref[...] += partial

    @pl.when(i == pl.num_programs(0) - 1)
    def _finalize():
        out_ref[...] = out_ref[...] * inv_total


def norm0_loss_pallas(x, *, row_tile=512):
    """JAX/Pallas equivalent of Norm0Loss.forward: mean of (x > 0)."""
    total = int(x.size)
    if total == 0:
        return jnp.float32(jnp.nan)  # matches mean of empty tensor

    flat = x.reshape(-1)

    # Lane-dense 2-D layout: [rows, 128], rows padded to a multiple of the tile.
    rows = -(-total // _LANE)
    rows8 = -(-rows // 8) * 8
    tile = min(int(row_tile), rows8)
    tile = max(8, -(-tile // 8) * 8)                 # multiple of 8 sublanes
    rows_padded = -(-rows8 // tile) * tile
    padded_total = rows_padded * _LANE

    if padded_total != total:
        # Pad with zeros: (0 > 0) == False, so padding never counts.
        flat = jnp.pad(flat, (0, padded_total - total))
    x2d = flat.reshape(rows_padded, _LANE)

    grid = rows_padded // tile
    itemsize = jnp.dtype(x.dtype).itemsize

    kernel = functools.partial(_norm0_kernel, inv_total=1.0 / float(total))

    out = pl.pallas_call(
        kernel,
        out_shape=jax.ShapeDtypeStruct((1, 1), jnp.float32),
        grid=(grid,),
        in_specs=[pl.BlockSpec((tile, _LANE), lambda i: (i, 0))],
        out_specs=pl.BlockSpec((1, 1), lambda i: (0, 0)),
        compiler_params=pltpu.CompilerParams(
            dimension_semantics=("arbitrary",),      # reduction axis (resident out)
        ),
        cost_estimate=pl.CostEstimate(
            flops=2 * padded_total,                  # compare + add per element
            transcendentals=0,
            bytes_accessed=padded_total * itemsize + 4,
        ),
    )(x2d)

    return out[0, 0]


def norm0_loss_ref(x):
    """Pure-JAX reference mirroring the PyTorch forward."""
    return jnp.mean((x > 0).astype(jnp.float32))


if __name__ == "__main__":
    key = jax.random.PRNGKey(0)
    k1, k2, k3 = jax.random.split(key, 3)

    # Shape implied by the module's generic elementwise forward: [B, C, H, W].
    x1 = jax.random.normal(k1, (2, 4, 16, 16), dtype=jnp.float32)       # aligned, grid=1
    x2 = jax.random.normal(k2, (3, 5, 7), dtype=jnp.float32)            # ragged -> padded
    x3 = jax.random.normal(k3, (16, 128, 64), dtype=jnp.float32)        # multi-tile grid

    for x in (x1, x2, x3):
        loss = jax.block_until_ready(norm0_loss_pallas(x))
        ref = norm0_loss_ref(x)
        assert jnp.allclose(loss, ref, rtol=1e-6, atol=1e-6), (x.shape, loss, ref)

    print("KERNEL_OK")
</pallas_src>

<mosaic_0001>
module attributes {stable_mosaic.version = 11 : i64} {
  func.func @_norm0_kernel(%arg0: i32, %arg1: memref<16x128xf32, #tpu.memory_space<vmem>>, %arg2: memref<1x1xf32, #tpu.memory_space<vmem>>) attributes {dimension_semantics = [#tpu.dimension_semantics<arbitrary>], iteration_bounds = array<i64: 1>, scalar_prefetch = 0 : i64, scratch_operands = 0 : i64, tpu.core_type = #tpu.core_type<tc>, window_params = [{transform_indices = @transform_0, window_bounds = array<i64: 16, 128>}, {pipeline_mode = #tpu.pipeline_mode<synchronous>, transform_indices = @transform_1, window_bounds = array<i64: 1, 1>}]} {
    %c0_i32 = arith.constant 0 : i32
    %0 = arith.cmpi eq, %arg0, %c0_i32 : i32
    %1 = arith.extui %0 : i1 to i32
    %c0_i32_0 = arith.constant 0 : i32
    %2 = arith.cmpi ne, %1, %c0_i32_0 : i32
    scf.if %2 {
      %cst_10 = arith.constant 0.000000e+00 : f32
      %18 = vector.broadcast %cst_10 : f32 to vector<1x1xf32>
      %c0_11 = arith.constant 0 : index
      %c0_12 = arith.constant 0 : index
      %19 = vector.load %arg2[%c0_11, %c0_12] : memref<1x1xf32, #tpu.memory_space<vmem>>, vector<1x1xf32>
      tpu.vector_store %arg2[%c0_11, %c0_12], %18 {strides = array<i32>} : memref<1x1xf32, #tpu.memory_space<vmem>>, vector<1x1xf32>,
    } else {
    }
    %c0 = arith.constant 0 : index
    %c0_1 = arith.constant 0 : index
    %3 = vector.load %arg1[%c0, %c0_1] : memref<16x128xf32, #tpu.memory_space<vmem>>, vector<16x128xf32>
    %cst = arith.constant 0.000000e+00 : f32
    %4 = vector.broadcast %cst : f32 to vector<16x128xf32>
    %5 = arith.cmpf ogt, %3, %4 : vector<16x128xf32>
    %6 = arith.extui %5 : vector<16x128xi1> to vector<16x128xi32>
    %7 = arith.sitofp %6 : vector<16x128xi32> to vector<16x128xf32>
    %cst_2 = arith.constant dense<0.000000e+00> : vector<16xf32>
    %8 = vector.multi_reduction <add>, %7, %cst_2 [1] : vector<16x128xf32> to vector<16xf32>
    %9 = vector.shape_cast %8 : vector<16xf32> to vector<16x1xf32>
    %cst_3 = arith.constant dense<0.000000e+00> : vector<1xf32>
    %10 = vector.multi_reduction <add>, %9, %cst_3 [0] : vector<16x1xf32> to vector<1xf32>
    %11 = vector.shape_cast %10 : vector<1xf32> to vector<1x1xf32>
    %c0_4 = arith.constant 0 : index
    %c0_5 = arith.constant 0 : index
    %12 = vector.load %arg2[%c0_4, %c0_5] : memref<1x1xf32, #tpu.memory_space<vmem>>, vector<1x1xf32>
    %13 = arith.addf %12, %11 : vector<1x1xf32>
    %c0_6 = arith.constant 0 : index
    %c0_7 = arith.constant 0 : index
    %14 = vector.load %arg2[%c0_6, %c0_7] : memref<1x1xf32, #tpu.memory_space<vmem>>, vector<1x1xf32>
    tpu.vector_store %arg2[%c0_6, %c0_7], %13 {strides = array<i32>} : memref<1x1xf32, #tpu.memory_space<vmem>>, vector<1x1xf32>,
    %c0_i32_8 = arith.constant 0 : i32
    %15 = arith.cmpi eq, %arg0, %c0_i32_8 : i32
    %16 = arith.extui %15 : i1 to i32
    %c0_i32_9 = arith.constant 0 : i32
    %17 = arith.cmpi ne, %16, %c0_i32_9 : i32
    scf.if %17 {
      %c0_10 = arith.constant 0 : index
      %c0_11 = arith.constant 0 : index
      %18 = vector.load %arg2[%c0_10, %c0_11] : memref<1x1xf32, #tpu.memory_space<vmem>>, vector<1x1xf32>
      %cst_12 = arith.constant 4.8828125E-4 : f32
      %19 = vector.broadcast %cst_12 : f32 to vector<1x1xf32>
      %20 = arith.mulf %18, %19 : vector<1x1xf32>
      %c0_13 = arith.constant 0 : index
      %c0_14 = arith.constant 0 : index
      %21 = vector.load %arg2[%c0_13, %c0_14] : memref<1x1xf32, #tpu.memory_space<vmem>>, vector<1x1xf32>
      tpu.vector_store %arg2[%c0_13, %c0_14], %20 {strides = array<i32>} : memref<1x1xf32, #tpu.memory_space<vmem>>, vector<1x1xf32>,
    } else {
    }
    return
  }
  func.func @transform_0(%arg0: i32) -> (i32, i32) {
    %c0_i32 = arith.constant 0 : i32
    %c0_i32_0 = arith.constant 0 : i32
    return %arg0, %c0_i32 : i32, i32
  }
  func.func @transform_1(%arg0: i32) -> (i32, i32) {
    %c0_i32 = arith.constant 0 : i32
    %c0_i32_0 = arith.constant 0 : i32
    %c0_i32_1 = arith.constant 0 : i32
    return %c0_i32, %c0_i32_0 : i32, i32
  }
}

</mosaic_0001>

<llo_original>
// kernel: tpu_custom_call.1
$region0: #{tpu_custom_call.1}
  #allocation0 [shape = 'u32[]', space=smem, size = 0x4, offset = 0x4, fixed_abs, tag = 'smem constant byte address 0x4 - core index']
  #allocation1 [shape = 'u32[72,128]{1,0:T(1,128)}', space=vmem, size = 0x9000, scoped, tag = 'internal scratch']
  %s0 = inlined_call_operand.hbm [shape: f32[16,128], index: 0, kind: input, shape index: {}]
  %s1 = inlined_call_operand.hbm [shape: f32[1,1], index: 1, kind: output, shape index: {}]
  %s2 = sld [smem:[#allocation0]]
  $region26: #{tpu_custom_call.1} parent=0
    _
  %s4 = ssub.s32 1, %s2
  %s5 = scalar_select 0, %s4, %s2
  $region1: #{tpu_custom_call.1} parent=0
    #allocation2 [shape = 'u8[8192]{0}', space=vmem, size = 0x2000, scoped, tag = 'input window, operand 0, single buffered']
    #allocation3 [shape = 's32[1]{0}', space=sflag, size = 0x4, scoped, tag = 'scoped memory for tpu_custom_call.1']
    #allocation4 [shape = 's32[1]{0}', space=sflag, size = 0x4, scoped, tag = 'scoped memory for tpu_custom_call.1']
    #allocation5 [shape = 'u8[512]{0}', space=vmem, size = 0x400, scoped, tag = 'output window, operand 0, single buffered']
    %6 = vsyncpa [#allocation3], 0
    %7 = vsyncpa [#allocation4], 0
    // Predicated region
    $region2: #{tpu_custom_call.1} parent=1 // pred_check
      _
    $region3: #{tpu_custom_call.1} parent=1 // pred_check_branch
      %9 = sbr.rel (0) target = $region5
    $region4: #{tpu_custom_call.1} parent=1 // pred_region
      %11 = vsyncadd [#allocation3], 0
      %s12 = sshll.u32 %s0, 4
      %s13 = int_to_ptr.hbm [resolvable:$true] %s12
      %s14 = sshll.u32 [#allocation2], 4
      %s15 = int_to_ptr.vmem [resolvable:$true] %s14
      %20 = dma.hbm_to_vmem [thread:$0]  %s13, 256, %s15, [#allocation3], 128, 128, 8
    $region5: #{tpu_custom_call.1} parent=1 // pred_fallthru
      _
    // Predicated region
    $region6: #{tpu_custom_call.1} parent=1 // pred_check
      _
    $region7: #{tpu_custom_call.1} parent=1 // pred_check_branch
      %22 = sbr.rel (0) target = $region9
    $region8: #{tpu_custom_call.1} parent=1 // pred_region
      %24 = dma.done [#allocation3], 256
    $region9: #{tpu_custom_call.1} parent=1 // pred_fallthru
      _
    %p25 = scmp.eq.s32.totalorder 0, 0
    // Predicated region
    $region10: #{tpu_custom_call.1} parent=1 // pred_check
      %p26 = pneg %p25
    $region11: #{tpu_custom_call.1} parent=1 // pred_check_branch
      %28 = sbr.rel (%p26) target = $region13
    $region12: #{tpu_custom_call.1} parent=1 // pred_region
      %vm29 = vcmask 0
      %30 = vst.msk [vmem:[#allocation5] sm:$0x1] %vm29, 0.0
    $region13: #{tpu_custom_call.1} parent=1 // pred_fallthru
      _
    %v31 = vld [vmem:[#allocation2] sm:$0xff]
    %v32 = vld [vmem:[#allocation2 + $0x8] sm:$0xff]
    %vm33 = vcmp.gt.f32.partialorder %v31, 0.0
    %vm34 = vcmp.gt.f32.partialorder %v32, 0.0
    %v35 = vsel %vm33, 1, 0
    %v36 = vsel %vm34, 1, 0
    %v37 = vcvt.s32.f32 %v35
    %v38 = vcvt.s32.f32 %v36
    %39 = vadd.xlane.f32.xlu0 %v37
    %v40 = vpop.xlane.xlu0 %39
    %41 = vadd.xlane.f32.xlu0 %v38
    %v42 = vpop.xlane.xlu0 %41
    %v43 = vadd.f32 %v40, %v42
    %v44 = vrot.slane %v43, 4
    %v45 = vadd.f32 %v43, %v44
    %v46 = vrot.slane %v45, 2
    %v47 = vadd.f32 %v45, %v46
    %v48 = vrot.slane %v47, 1
    %v49 = vadd.f32 %v47, %v48
    %v50 = vld [vmem:[#allocation5] sm:$0x1]
    %v51 = vadd.f32 %v50, %v49
    %vm52 = vcmask 0
    %53 = vst.msk [vmem:[#allocation5] sm:$0x1] %vm52, %v51
    // Predicated region
    $region14: #{tpu_custom_call.1} parent=1 // pred_check
      %p54 = pneg %p25
    $region15: #{tpu_custom_call.1} parent=1 // pred_check_branch
      %56 = sbr.rel (%p54) target = $region17
    $region16: #{tpu_custom_call.1} parent=1 // pred_region
      %v57 = vld [vmem:[#allocation5] sm:$0x1]
      %v58 = vmul.f32 %v57, 0.00048828125
      %59 = vst.msk [vmem:[#allocation5] sm:$0x1] %vm52, %v58
    $region17: #{tpu_custom_call.1} parent=1 // pred_fallthru
      _
    // Predicated region
    $region18: #{tpu_custom_call.1} parent=1 // pred_check
      _
    $region19: #{tpu_custom_call.1} parent=1 // pred_check_branch
      %61 = sbr.rel (0) target = $region21
    $region20: #{tpu_custom_call.1} parent=1 // pred_region
      %63 = vsyncadd [#allocation4], 0
      %s65 = sshll.u32 [#allocation5], 4
      %s66 = int_to_ptr.vmem [resolvable:$true] %s65
      %s67 = sshll.u32 %s1, 4
      %s68 = int_to_ptr.hbm [resolvable:$true] %s67
      %70 = dma.vmem_to_hbm [thread:$0]  %s66, 16, %s68, [#allocation4]
    $region21: #{tpu_custom_call.1} parent=1 // pred_fallthru
      _
    // Predicated region
    $region22: #{tpu_custom_call.1} parent=1 // pred_check
      _
    $region23: #{tpu_custom_call.1} parent=1 // pred_check_branch
      %72 = sbr.rel (0) target = $region25
    $region24: #{tpu_custom_call.1} parent=1 // pred_region
      %74 = dma.done [#allocation4], 16
    $region25: #{tpu_custom_call.1} parent=1 // pred_fallthru
      _
    %75 = vsyncpa [#allocation3], 1
    %76 = vsyncpa [#allocation4], 1

</llo_original>
